<compile_context>
chip_gen: v6e
topology: v6e:2x2x1
jax: 0.10.0
libtpu: 0.0.40
codegen_flags: <defaults>
</compile_context>

<pallas_src>
import functools

import jax
import jax.numpy as jnp
from jax import lax
from jax.experimental import pallas as pl
from jax.experimental.pallas import tpu as pltpu


# ----------------------------- helpers --------------------------------------

_VMEM_BUDGET_BYTES = 12 * 1024 * 1024  # conservative double-buffered footprint


def _round_up(x, m):
    return ((x + m - 1) // m) * m


def _sublane(dtype):
    # Minimum sublane multiple: 8 for 4-byte, 16 for 2-byte, 32 for 1-byte.
    return max(8, 32 // jnp.dtype(dtype).itemsize)


def _largest_dividing_tile(dim_pad, align, cap):
    """Largest multiple of `align` that divides dim_pad and is <= cap."""
    cap = min(cap, dim_pad)
    best = align
    t = align
    while t <= cap:
        if dim_pad % t == 0:
            best = t
        t += align
    return best


# ----------------------------- kernels ---------------------------------------

def _linear_kernel_single_pass(x_ref, w_ref, b_ref, o_ref):
    """Whole K in one block: fused matmul + bias, no accumulator scratch.

    x_ref: (tm, k_pad), w_ref: (k_pad, tn), b_ref: (1, tn), o_ref: (tm, tn)
    """
    o_ref[...] = (jnp.dot(x_ref[...], w_ref[...],
                          preferred_element_type=jnp.float32)
                  + b_ref[...].astype(jnp.float32)).astype(o_ref.dtype)


def _linear_kernel_k_tiled(x_ref, w_ref, b_ref, o_ref, acc_ref):
    """K-tiled path: f32 VMEM accumulator, bias added in the epilogue.

    x_ref: (tm, tk), w_ref: (tk, tn), b_ref: (1, tn), o_ref/acc_ref: (tm, tn)
    """
    k = pl.program_id(2)

    @pl.when(k == 0)
    def _():
        acc_ref[...] = jnp.zeros_like(acc_ref)

    acc_ref[...] += jnp.dot(x_ref[...], w_ref[...],
                            preferred_element_type=jnp.float32)

    @pl.when(k == pl.num_programs(2) - 1)
    def _():
        o_ref[...] = (acc_ref[...]
                      + b_ref[...].astype(jnp.float32)).astype(o_ref.dtype)


# ----------------------------- parameter prep --------------------------------

def prepare_linear_norm_params(weight, bias=None, dtype=None):
    """One-time offline transform of PyTorch-layout params.

    weight: (out_dim, in_dim)  ->  w_t: (K_pad, N_pad) = zero-padded weight.T
    bias:   (out_dim,) or None ->  b:   (1, N_pad)
    Returns (w_t, b, out_dim). Do this once at init, NOT per forward call.
    """
    out_dim, in_dim = weight.shape
    wdt = dtype or weight.dtype
    k_pad = _round_up(in_dim, 128)
    n_pad = _round_up(out_dim, 128)

    w_t = jnp.zeros((k_pad, n_pad), wdt)
    w_t = w_t.at[:in_dim, :out_dim].set(jnp.asarray(weight, wdt).T)

    b_row = jnp.zeros((1, n_pad), wdt)
    if bias is not None:
        b_row = b_row.at[0, :out_dim].set(jnp.asarray(bias, wdt))
    return w_t, b_row, out_dim


# ----------------------------- forward ----------------------------------------

@functools.partial(jax.jit, static_argnums=(3,))
def linear_norm_forward(x, w_t, b, out_dim):
    """y = x @ W.T + b, with W pre-transposed/padded to w_t (K_pad, N_pad).

    x:     (..., in_dim)
    w_t:   (K_pad, N_pad)   from prepare_linear_norm_params
    b:     (1, N_pad)
    """
    in_dim = x.shape[-1]
    k_pad, n_pad = w_t.shape
    lead_shape = x.shape[:-1]

    x2d = x.reshape(-1, in_dim)                      # (M, K)
    m = x2d.shape[0]

    itemsize = jnp.dtype(x.dtype).itemsize
    sub = _sublane(x.dtype)
    m_pad = _round_up(m, sub)

    # Only the activation is padded per call (weight/bias are pre-padded).
    # Zero K columns contribute nothing; padded M rows are sliced off below.
    if (m_pad, k_pad) != (m, in_dim):
        x2d = jnp.pad(x2d, ((0, m_pad - m), (0, k_pad - in_dim)))

    # --- tile selection: largest aligned divisors of the padded dims --------
    tm = _largest_dividing_tile(m_pad, sub, 512)
    tn = _largest_dividing_tile(n_pad, 128, 512)

    # K tile sized against a double-buffered VMEM budget:
    #   out double-buffer + f32 acc + 2*(x_tile + w_tile) per K element.
    fixed = 2 * tm * tn * itemsize + tm * tn * 4
    per_k = 2 * (tm + tn) * itemsize
    tk_cap = max(128, ((_VMEM_BUDGET_BYTES - fixed) // per_k) // 128 * 128)
    tk = _largest_dividing_tile(k_pad, 128, tk_cap)

    m_blocks = m_pad // tm
    n_blocks = n_pad // tn
    k_blocks = k_pad // tk

    cost = pl.CostEstimate(
        flops=2 * m_pad * k_pad * n_pad,
        transcendentals=0,
        bytes_accessed=(m_pad * k_pad * n_blocks        # x re-read per N block
                        + k_pad * n_pad * m_blocks      # W re-read per M block
                        + m_pad * n_pad + n_pad) * itemsize,
    )

    if k_blocks == 1:
        # Single-pass: whole K strip in VMEM, fused bias, no scratch.
        out2d = pl.pallas_call(
            _linear_kernel_single_pass,
            out_shape=jax.ShapeDtypeStruct((m_pad, n_pad), x.dtype),
            grid_spec=pltpu.PrefetchScalarGridSpec(
                num_scalar_prefetch=0,
                grid=(m_blocks, n_blocks),
                in_specs=[
                    pl.BlockSpec((tm, tk), lambda i, j: (i, 0)),   # x
                    pl.BlockSpec((tk, tn), lambda i, j: (0, j)),   # W.T (padded)
                    pl.BlockSpec((1, tn), lambda i, j: (0, j)),    # bias
                ],
                out_specs=pl.BlockSpec((tm, tn), lambda i, j: (i, j)),
            ),
            compiler_params=pltpu.CompilerParams(
                dimension_semantics=("parallel", "parallel")),
            cost_estimate=cost,
        )(x2d, w_t, b)
    else:
        # Large-K fallback: K-innermost reduction with f32 VMEM accumulator.
        out2d = pl.pallas_call(
            _linear_kernel_k_tiled,
            out_shape=jax.ShapeDtypeStruct((m_pad, n_pad), x.dtype),
            grid_spec=pltpu.PrefetchScalarGridSpec(
                num_scalar_prefetch=0,
                grid=(m_blocks, n_blocks, k_blocks),
                in_specs=[
                    pl.BlockSpec((tm, tk), lambda i, j, k: (i, k)),  # x
                    pl.BlockSpec((tk, tn), lambda i, j, k: (k, j)),  # W.T
                    pl.BlockSpec((1, tn), lambda i, j, k: (0, j)),   # bias
                ],
                out_specs=pl.BlockSpec((tm, tn), lambda i, j, k: (i, j)),
                scratch_shapes=[pltpu.VMEM((tm, tn), jnp.float32)],
            ),
            compiler_params=pltpu.CompilerParams(
                dimension_semantics=("parallel", "parallel", "arbitrary")),
            cost_estimate=cost,
        )(x2d, w_t, b)

    out2d = out2d[:m, :out_dim]
    return out2d.reshape(*lead_shape, out_dim)


# ----------------------------- init (matches LinearNorm.__init__) ------------

def init_linear_norm_params(key, in_dim, out_dim, w_init_gain="linear",
                            dtype=jnp.float32):
    """weight: xavier_uniform_ (gain=calculate_gain(w_init_gain));
    bias: torch.nn.Linear default uniform(-1/sqrt(fan_in), 1/sqrt(fan_in))."""
    k_w, k_b = jax.random.split(key)
    gain = 1.0  # calculate_gain('linear') == 1.0
    bound_w = gain * (6.0 / (in_dim + out_dim)) ** 0.5
    weight = jax.random.uniform(k_w, (out_dim, in_dim), dtype=dtype,
                                minval=-bound_w, maxval=bound_w)
    bound_b = 1.0 / (in_dim ** 0.5)
    bias = jax.random.uniform(k_b, (out_dim,), dtype=dtype,
                              minval=-bound_b, maxval=bound_b)
    return weight, bias


# ----------------------------- demo / checks ----------------------------------

if __name__ == "__main__":
    key = jax.random.PRNGKey(0)
    k_x, k_p = jax.random.split(key)

    # 1) Small shapes consistent with the module: batch=2, seq=8, in=32, out=64.
    batch, seq, in_dim, out_dim = 2, 8, 32, 64
    x = jax.random.normal(k_x, (batch, seq, in_dim), dtype=jnp.float32)
    weight, bias = init_linear_norm_params(k_p, in_dim, out_dim)
    w_t, b_row, nd = prepare_linear_norm_params(weight, bias)

    y = linear_norm_forward(x, w_t, b_row, nd)
    jax.block_until_ready(y)
    y_ref = jnp.dot(x, weight.T, precision=lax.Precision.HIGHEST) + bias
    assert y.shape == (batch, seq, out_dim)
    assert jnp.allclose(y, y_ref, atol=1e-5, rtol=1e-5)

    # 2) Non-aligned shapes: N=513 pads to 640 (tn=128, no 33% waste),
    #    K=300 pads to 384 and runs the single-pass kernel.
    k_x2, k_p2 = jax.random.split(k_x)
    x2 = jax.random.normal(k_x2, (3, 37, 300), dtype=jnp.float32)
    w2, b2 = init_linear_norm_params(k_p2, 300, 513)
    w2_t, b2_row, nd2 = prepare_linear_norm_params(w2, b2)
    y2 = linear_norm_forward(x2, w2_t, b2_row, nd2)
    jax.block_until_ready(y2)
    y2_ref = jnp.dot(x2, w2.T, precision=lax.Precision.HIGHEST) + b2
    assert y2.shape == (3, 37, 513)
    assert jnp.allclose(y2, y2_ref, atol=2e-4, rtol=2e-4)

    # 3) Large K exercises the K-tiled accumulator fallback (tk < k_pad).
    k_x3, k_p3 = jax.random.split(k_x2)
    x3 = jax.random.normal(k_x3, (4, 64, 2560), dtype=jnp.float32)
    w3, b3 = init_linear_norm_params(k_p3, 2560, 1024)
    w3_t, b3_row, nd3 = prepare_linear_norm_params(w3, b3)
    y3 = linear_norm_forward(x3, w3_t, b3_row, nd3)
    jax.block_until_ready(y3)
    y3_ref = jnp.dot(x3, w3.T, precision=lax.Precision.HIGHEST) + b3
    assert y3.shape == (4, 64, 1024)
    assert jnp.allclose(y3, y3_ref, atol=2e-4, rtol=2e-4)

    print("KERNEL_OK")
</pallas_src>

<mosaic_0001>
module attributes {stable_mosaic.version = 11 : i64} {
  func.func @_linear_kernel_single_pass(%arg0: i32, %arg1: i32, %arg2: memref<16x128xf32, #tpu.memory_space<vmem>>, %arg3: memref<128x128xf32, #tpu.memory_space<vmem>>, %arg4: memref<1x128xf32, #tpu.memory_space<vmem>>, %arg5: memref<16x128xf32, #tpu.memory_space<vmem>>) attributes {dimension_semantics = [#tpu.dimension_semantics<parallel>, #tpu.dimension_semantics<parallel>], iteration_bounds = array<i64: 1, 1>, scalar_prefetch = 0 : i64, scratch_operands = 0 : i64, tpu.core_type = #tpu.core_type<tc>, window_params = [{transform_indices = @transform_0, window_bounds = array<i64: 16, 128>}, {transform_indices = @transform_1, window_bounds = array<i64: 128, 128>}, {transform_indices = @transform_2, window_bounds = array<i64: 1, 128>}, {transform_indices = @transform_3, window_bounds = array<i64: 16, 128>}]} {
    %c0 = arith.constant 0 : index
    %c0_0 = arith.constant 0 : index
    %0 = vector.load %arg2[%c0, %c0_0] : memref<16x128xf32, #tpu.memory_space<vmem>>, vector<16x128xf32>
    %c0_1 = arith.constant 0 : index
    %c0_2 = arith.constant 0 : index
    %1 = vector.load %arg3[%c0_1, %c0_2] : memref<128x128xf32, #tpu.memory_space<vmem>>, vector<128x128xf32>
    %cst = arith.constant dense<0.000000e+00> : vector<16x128xf32>
    %2 = tpu.matmul %0, %1, %cst {dimension_numbers = #tpu.dot_dimension_numbers<[1], [0], [0], [1], [0, 0, 1, 1], [], []>} : vector<16x128xf32>, vector<128x128xf32>, vector<16x128xf32> -> vector<16x128xf32>
    %c0_3 = arith.constant 0 : index
    %c0_4 = arith.constant 0 : index
    %3 = vector.load %arg4[%c0_3, %c0_4] : memref<1x128xf32, #tpu.memory_space<vmem>>, vector<1x128xf32>
    %4 = vector.broadcast %3 : vector<1x128xf32> to vector<16x128xf32>
    %5 = arith.addf %2, %4 : vector<16x128xf32>
    %c0_5 = arith.constant 0 : index
    %c0_6 = arith.constant 0 : index
    %6 = vector.load %arg5[%c0_5, %c0_6] : memref<16x128xf32, #tpu.memory_space<vmem>>, vector<16x128xf32>
    tpu.vector_store %arg5[%c0_5, %c0_6], %5 {strides = array<i32>} : memref<16x128xf32, #tpu.memory_space<vmem>>, vector<16x128xf32>,
    return
  }
  func.func @transform_0(%arg0: i32, %arg1: i32) -> (i32, i32) {
    %c0_i32 = arith.constant 0 : i32
    %c0_i32_0 = arith.constant 0 : i32
    return %arg0, %c0_i32 : i32, i32
  }
  func.func @transform_1(%arg0: i32, %arg1: i32) -> (i32, i32) {
    %c0_i32 = arith.constant 0 : i32
    %c0_i32_0 = arith.constant 0 : i32
    return %c0_i32, %arg1 : i32, i32
  }
  func.func @transform_2(%arg0: i32, %arg1: i32) -> (i32, i32) {
    %c0_i32 = arith.constant 0 : i32
    %c0_i32_0 = arith.constant 0 : i32
    return %c0_i32, %arg1 : i32, i32
  }
  func.func @transform_3(%arg0: i32, %arg1: i32) -> (i32, i32) {
    %c0_i32 = arith.constant 0 : i32
    return %arg0, %arg1 : i32, i32
  }
}

</mosaic_0001>

<llo_original>
// kernel: linear_norm_forward.1
$region0: #{linear_norm_forward.1}
  #allocation0 [shape = 'u32[]', space=smem, size = 0x4, offset = 0x4, fixed_abs, tag = 'smem constant byte address 0x4 - core index']
  #allocation1 [shape = 'u32[144,128]{1,0:T(1,128)}', space=vmem, size = 0x12000, scoped, tag = 'internal scratch']
  %s0 = inlined_call_operand.vmem [shape: f32[16,128], index: 0, kind: input, shape index: {}]
  %s1 = inlined_call_operand.hbm [shape: f32[128,128], index: 1, kind: input, shape index: {}]
  %s2 = inlined_call_operand.vmem [shape: f32[1,128], index: 2, kind: input, shape index: {}]
  %s3 = inlined_call_operand.vmem [shape: f32[16,128], index: 3, kind: output, shape index: {}]
  %s4 = sld [smem:[#allocation0]]
  $region26: #{linear_norm_forward.1} parent=0
    _
  %s6 = ssub.s32 1, %s4
  %s7 = scalar_select 0, %s6, %s4
  $region1: #{linear_norm_forward.1} parent=0
    #allocation2 [shape = 'u8[65536]{0}', space=vmem, size = 0x10000, scoped, tag = 'input window, operand 1, single buffered']
    #allocation3 [shape = 's32[1]{0}', space=sflag, size = 0x4, scoped, tag = 'scoped memory for linear_norm_forward.1']
    %8 = vsyncpa [#allocation3], 0
    // Predicated region
    $region2: #{linear_norm_forward.1} parent=1 // pred_check
      _
    $region3: #{linear_norm_forward.1} parent=1 // pred_check_branch
      %10 = sbr.rel (0) target = $region5
    $region4: #{linear_norm_forward.1} parent=1 // pred_region
      _
    $region5: #{linear_norm_forward.1} parent=1 // pred_fallthru
      _
    // Predicated region
    $region6: #{linear_norm_forward.1} parent=1 // pred_check
      _
    $region7: #{linear_norm_forward.1} parent=1 // pred_check_branch
      %12 = sbr.rel (0) target = $region9
    $region8: #{linear_norm_forward.1} parent=1 // pred_region
      %s14 = ssub.s32 2048, 2048
      %15 = vsyncadd [#allocation3], %s14
      %s16 = sshll.u32 [#allocation2], 4
      %s17 = int_to_ptr.vmem [resolvable:$true] %s16
      %22 = dma.hbm_to_vmem [thread:$0]  %s1, 2048, %s17, [#allocation3], 128, 128, 8
    $region9: #{linear_norm_forward.1} parent=1 // pred_fallthru
      _
    // Predicated region
    $region10: #{linear_norm_forward.1} parent=1 // pred_check
      _
    $region11: #{linear_norm_forward.1} parent=1 // pred_check_branch
      %24 = sbr.rel (0) target = $region13
    $region12: #{linear_norm_forward.1} parent=1 // pred_region
      _
    $region13: #{linear_norm_forward.1} parent=1 // pred_fallthru
      _
    // Predicated region
    $region14: #{linear_norm_forward.1} parent=1 // pred_check
      _
    $region15: #{linear_norm_forward.1} parent=1 // pred_check_branch
      %26 = sbr.rel (0) target = $region17
    $region16: #{linear_norm_forward.1} parent=1 // pred_region
      %27 = dma.done [#allocation3], 2048
    $region17: #{linear_norm_forward.1} parent=1 // pred_fallthru
      _
    %v28 = vld [vmem:[%s0] sm:$0xff]
    %v29 = vld [vmem:[%s0 + $0x8] sm:$0xff]
    %v30 = vld [vmem:[#allocation2] sm:$0xff]
    %v31 = vld [vmem:[#allocation2 + $0x8] sm:$0xff]
    %v32 = vld [vmem:[#allocation2 + $0x10] sm:$0xff]
    %v33 = vld [vmem:[#allocation2 + $0x18] sm:$0xff]
    %v34 = vld [vmem:[#allocation2 + $0x20] sm:$0xff]
    %v35 = vld [vmem:[#allocation2 + $0x28] sm:$0xff]
    %v36 = vld [vmem:[#allocation2 + $0x30] sm:$0xff]
    %v37 = vld [vmem:[#allocation2 + $0x38] sm:$0xff]
    %v38 = vld [vmem:[#allocation2 + $0x40] sm:$0xff]
    %v39 = vld [vmem:[#allocation2 + $0x48] sm:$0xff]
    %v40 = vld [vmem:[#allocation2 + $0x50] sm:$0xff]
    %v41 = vld [vmem:[#allocation2 + $0x58] sm:$0xff]
    %v42 = vld [vmem:[#allocation2 + $0x60] sm:$0xff]
    %v43 = vld [vmem:[#allocation2 + $0x68] sm:$0xff]
    %v44 = vld [vmem:[#allocation2 + $0x70] sm:$0xff]
    %v45 = vld [vmem:[#allocation2 + $0x78] sm:$0xff]
    %v46 = vld [vmem:[%s2] sm:$0x1]
    %v48 = vlaneseq
    %v49 = vshrl.u32 %v48, 7
    %v50 = vsub.s32 0, %v49
    %v51 = vrot.slane %v46, %v50
    %53 = vmatprep.subr.mxu0 0.0
    %54 = vmatpush1.msra.mxu0 %v45
    %55 = vmatprep.subr.mxu0 0.0
    %56 = vmatpush1.msra.mxu0 %v44
    %57 = vmatprep.subr.mxu0 0.0
    %58 = vmatpush1.msra.mxu0 %v43
    %59 = vmatprep.subr.mxu0 0.0
    %60 = vmatpush1.msra.mxu0 %v42
    %61 = vmatprep.subr.mxu0 0.0
    %62 = vmatpush1.msra.mxu0 %v41
    %63 = vmatprep.subr.mxu0 0.0
    %64 = vmatpush1.msra.mxu0 %v40
    %65 = vmatprep.subr.mxu0 0.0
    %66 = vmatpush1.msra.mxu0 %v39
    %67 = vmatprep.subr.mxu0 0.0
    %68 = vmatpush1.msra.mxu0 %v38
    %69 = vmatprep.subr.mxu0 0.0
    %70 = vmatpush1.msra.mxu0 %v37
    %71 = vmatprep.subr.mxu0 0.0
    %72 = vmatpush1.msra.mxu0 %v36
    %73 = vmatprep.subr.mxu0 0.0
    %74 = vmatpush1.msra.mxu0 %v35
    %75 = vmatprep.subr.mxu0 0.0
    %76 = vmatpush1.msra.mxu0 %v34
    %77 = vmatprep.subr.mxu0 0.0
    %78 = vmatpush1.msra.mxu0 %v33
    %79 = vmatprep.subr.mxu0 0.0
    %80 = vmatpush1.msra.mxu0 %v32
    %81 = vmatprep.subr.mxu0 0.0
    %82 = vmatpush1.msra.mxu0 %v31
    %83 = vmatprep.subr.mxu0 0.0
    %84 = vmatpush1.msra.mxu0 %v30
    %85 = vmatprep.subr.mxu0 0.0
    %86 = vmatpush2.msra.mxu0 0.0
    %87 = vmatprep.subr.mxu0 0.0
    %88 = vmatpush2.msra.mxu0 0.0
    %89 = vmatprep.subr.mxu0 0.0
    %90 = vmatpush2.msra.mxu0 0.0
    %91 = vmatprep.subr.mxu0 0.0
    %92 = vmatpush2.msra.mxu0 0.0
    %93 = vmatprep.subr.mxu0 0.0
    %94 = vmatpush2.msra.mxu0 0.0
    %95 = vmatprep.subr.mxu0 0.0
    %96 = vmatpush2.msra.mxu0 0.0
    %97 = vmatprep.subr.mxu0 0.0
    %98 = vmatpush2.msra.mxu0 0.0
    %99 = vmatprep.subr.mxu0 0.0
    %100 = vmatpush2.msra.mxu0 0.0
    %101 = vmatprep.subr.mxu0 0.0
    %102 = vmatpush2.msra.mxu0 0.0
    %103 = vmatprep.subr.mxu0 0.0
    %104 = vmatpush2.msra.mxu0 0.0
    %105 = vmatprep.subr.mxu0 0.0
    %106 = vmatpush2.msra.mxu0 0.0
    %107 = vmatprep.subr.mxu0 0.0
    %108 = vmatpush2.msra.mxu0 0.0
    %109 = vmatprep.subr.mxu0 0.0
    %110 = vmatpush2.msra.mxu0 0.0
    %111 = vmatprep.subr.mxu0 0.0
    %112 = vmatpush2.msra.mxu0 0.0
    %113 = vmatprep.subr.mxu0 0.0
    %114 = vmatpush2.msra.mxu0 0.0
    %115 = vmatprep.subr.mxu0 0.0
    %116 = vmatpush2.msra.mxu0 0.0
    %117 = vmatprep.mubr.f32.mxu0 0.0
    %118 = vmatmul.mubr.f32.gmra.mxu0 %v28
    %v119 = vpop.f32.mrf.mxu0
    %v120 = vadd.f32 %v51, %v119
    %v121 = vpop.f32.mrf.mxu0
    %122 = vmatprep.mubr.f32.mxu0 0.0
    %123 = vmatmul.mubr.f32.gmra.mxu0 %v29
    %v124 = vpop.f32.mrf.mxu0
    %v125 = vadd.f32 %v51, %v124
    %v126 = vpop.f32.mrf.mxu0
    %127 = vdwg.mxu0
    %128 = vst [vmem:[%s3] sm:$0xff] %v120
    %129 = vst [vmem:[%s3 + $0x8] sm:$0xff] %v125
    // Predicated region
    $region18: #{linear_norm_forward.1} parent=1 // pred_check
      _
    $region19: #{linear_norm_forward.1} parent=1 // pred_check_branch
      %131 = sbr.rel (0) target = $region21
    $region20: #{linear_norm_forward.1} parent=1 // pred_region
      _
    $region21: #{linear_norm_forward.1} parent=1 // pred_fallthru
      _
    // Predicated region
    $region22: #{linear_norm_forward.1} parent=1 // pred_check
      _
    $region23: #{linear_norm_forward.1} parent=1 // pred_check_branch
      %133 = sbr.rel (0) target = $region25
    $region24: #{linear_norm_forward.1} parent=1 // pred_region
      _
    $region25: #{linear_norm_forward.1} parent=1 // pred_fallthru
      _
    %134 = vsyncpa [#allocation3], 1

</llo_original>
